<compile_context>
chip_gen: v6e
topology: v6e:2x2x1
jax: 0.10.0
libtpu: 0.0.40
codegen_flags: <defaults>
</compile_context>

<pallas_src>
import functools

import jax
import jax.numpy as jnp
from jax.experimental import pallas as pl
from jax.experimental.pallas import tpu as pltpu


def _round_up(x, m):
    return (x + m - 1) // m * m


def _tpu_vmem_capacity_bytes():
    """Physical VMEM per TensorCore; falls back to 128 MiB if the query fails."""
    try:
        info = pltpu.get_tpu_info()
        cap = getattr(info, "vmem_capacity_bytes", None)
        if cap:
            return int(cap)
    except Exception:
        pass
    return 128 << 20


def _pick_hw_tile(HW, Kp, Cout, itemsize):
    """Lane tile of the flattened spatial extent (multiple of 128 dividing HW)."""
    if HW % 128 != 0 or HW <= 2048:
        # TODO(synk): remainder tiles for very large H*W not divisible by 128.
        return HW
    slab_cap = max(128, ((4 << 20) // max(Kp * itemsize, 1)) // 128 * 128)
    acc_cap = max(128, ((1 << 20) // max(Cout * 4, 1)) // 128 * 128)
    cap = min(2048, slab_cap, acc_cap)
    for t in range(cap, 127, -128):
        if HW % t == 0:
            return t
    return HW


def _plan_batch_block(N, per_image_bytes, fixed_bytes, vmem_cap):
    """Images per grid step + compiler VMEM limit, generation aware."""
    two_core_like = vmem_cap <= (96 << 20)     # v7x: 64 MiB/TC, 2 TCs share the grid
    frac = 4 if two_core_like else 3           # v5e/v6e: 128 MiB, single TensorCore
    budget = max(vmem_cap // frac - fixed_bytes, per_image_bytes)
    nb_cap = max(1, int(budget // max(per_image_bytes, 1)))
    divisors = [d for d in range(1, N + 1) if N % d == 0 and d <= nb_cap] or [1]
    nb = max(divisors)
    if two_core_like:
        # Prefer an even number of grid steps so both TensorCores stay balanced.
        even = [d for d in divisors if (N // d) % 2 == 0]
        if even:
            nb = max(even)
    need = nb * per_image_bytes + fixed_bytes + (4 << 20)
    vmem_limit = int(min(max(need, 32 << 20), (vmem_cap * 3) // 4))
    return nb, vmem_limit


def _coord_conv_kernel(x_ref, coords_ref, mask_ref, w_ref, o_ref,
                       feat_ref, col_ref, *,
                       W, KH, KW, Cin0, Cin, Cin_pad, m_pad, T):
    """One grid step processes Nb images.

    x_ref:      (Nb, Cin0, HW)   raw input channels, spatial flattened row-major
    coords_ref: (n_coord, HW)    precomputed xx/yy[/rr] channels (constant, resident)
    mask_ref:   (KW, HW)         horizontal validity mask per kw tap (constant)
    w_ref:      (Cout, Kp)       fused weights, taps-major, channel-padded
    o_ref:      (Nb, Cout, HW)   conv output; reshape to NCHW in the wrapper is free
    feat_ref:   (Cin_pad, L)     VMEM [zero halo | data+coord channels | zero halo]
    col_ref:    (Kp, T)          VMEM im2col slab for one HW tile
    """
    Nb = x_ref.shape[0]
    HW = o_ref.shape[2]
    n_coord = Cin - Cin0
    ph, pw = KH // 2, KW // 2
    n_tiles = HW // T

    # ---- per-grid-step init (tiny; safe under 'parallel' megacore split because
    #      nothing in the scratch is assumed to survive from another step) -------
    zero_margin = jnp.zeros((Cin_pad, m_pad), feat_ref.dtype)
    feat_ref[:, pl.ds(0, m_pad)] = zero_margin                 # top halo (conv pad)
    feat_ref[:, pl.ds(m_pad + HW, m_pad)] = zero_margin        # bottom halo
    if Cin_pad > Cin:                                          # channel-pad rows
        feat_ref[pl.ds(Cin, Cin_pad - Cin), pl.ds(m_pad, HW)] = (
            jnp.zeros((Cin_pad - Cin, HW), feat_ref.dtype))
    # Coord channels were computed once in the wrapper; just drop them in place.
    feat_ref[pl.ds(Cin0, n_coord), pl.ds(m_pad, HW)] = coords_ref[...]

    def process_image(i):
        # Raw channels -> slab interior (coords / halos / pad rows already set).
        feat_ref[pl.ds(0, Cin0), pl.ds(m_pad, HW)] = x_ref[i]
        for t in range(n_tiles):                     # static: all offsets static
            t0 = t * T
            # Pre-broadcast the column masks once per tile (JAX does not CSE
            # broadcast_in_dim inside the tap loop).
            tap_mask = []
            for kw in range(KW):
                if kw == pw:
                    tap_mask.append(None)
                else:
                    m = mask_ref[pl.ds(kw, 1), pl.ds(t0, T)]
                    tap_mask.append(jnp.broadcast_to(m, (Cin_pad, T)))
            # Fused im2col: one aligned (Cin_pad, T) block per tap.
            for kh in range(KH):
                for kw in range(KW):
                    off = m_pad + (kh - ph) * W + (kw - pw) + t0
                    patch = feat_ref[:, pl.ds(off, T)]
                    if tap_mask[kw] is not None:
                        patch = patch * tap_mask[kw]
                    col_ref[pl.ds((kh * KW + kw) * Cin_pad, Cin_pad), :] = patch
            # Single MXU contraction over K = KH*KW*Cin_pad for the whole tile.
            acc = jax.lax.dot_general(
                w_ref[...], col_ref[...], (((1,), (0,)), ((), ())),
                preferred_element_type=jnp.float32)            # (Cout, T)
            o_ref[i, :, pl.ds(t0, T)] = acc.astype(o_ref.dtype)

    if Nb == 1:
        process_image(0)
    else:
        def body(i, carry):
            process_image(i)
            return carry
        jax.lax.fori_loop(0, Nb, body, 0)


def coord_conv2d(x_nchw, weight, *, kernel_size=3, with_radius=False):
    """CoordConv2d forward (stride=1, bias=False, padding=kernel_size//2)."""
    N, Cin0, H, W = x_nchw.shape
    Cout, Cin, KH, KW = weight.shape
    assert KH == kernel_size and KW == kernel_size
    if KH % 2 == 0:
        raise NotImplementedError(
            "even kernel_size with padding=k//2 changes the output size; "
            "only odd kernel_size is supported")
    n_coord = 3 if with_radius else 2
    assert Cin == Cin0 + n_coord, (Cin, Cin0, n_coord)
    assert H >= 2 and W >= 2, "AddCoords divides by (H-1) and (W-1)"

    HW = H * W
    ph, pw = KH // 2, KW // 2
    margin = ph * W + pw                      # worst-case tap shift in flat space
    m_pad = _round_up(max(margin, 1), 128)    # lane-aligned interior start
    L = 2 * m_pad + HW
    Cin_pad = _round_up(Cin, 8)               # per-tap channel block (aligned sublanes)
    Kp = KH * KW * Cin_pad                    # fused contraction depth

    dtype = x_nchw.dtype
    itemsize = jnp.dtype(dtype).itemsize
    T = _pick_hw_tile(HW, Kp, Cout, itemsize)

    # ---- one-time constants, hoisted out of the kernel (tiny, N-independent) ----
    # AddCoords channels: xx varies along H, yy along W, optional radius channel.
    xx = (jnp.arange(H, dtype=jnp.float32) / (H - 1)) * 2.0 - 1.0
    yy = (jnp.arange(W, dtype=jnp.float32) / (W - 1)) * 2.0 - 1.0
    xx2 = jnp.broadcast_to(xx[:, None], (H, W))
    yy2 = jnp.broadcast_to(yy[None, :], (H, W))
    coord_rows = [xx2, yy2]
    if with_radius:
        coord_rows.append(jnp.sqrt((xx2 - 0.5) ** 2 + (yy2 - 0.5) ** 2))
    coords = jnp.stack(coord_rows, axis=0).reshape(n_coord, HW).astype(dtype)

    # Horizontal validity mask per kw tap: a shifted flat read wraps across image
    # rows exactly when the output column index + (kw - pw) leaves [0, W).
    wpos = jnp.arange(HW, dtype=jnp.int32) % W
    masks = jnp.stack(
        [((wpos + (kw - pw) >= 0) & (wpos + (kw - pw) < W)) for kw in range(KW)],
        axis=0).astype(dtype)                                   # (KW, HW)

    # torch (Cout, Cin, KH, KW) -> (Cout, KH*KW*Cin_pad), taps-major, channel-padded.
    w_t = jnp.transpose(weight, (2, 3, 0, 1)).reshape(KH * KW, Cout, Cin)
    w_t = jnp.pad(w_t, ((0, 0), (0, 0), (0, Cin_pad - Cin)))
    w_fused = jnp.transpose(w_t, (1, 0, 2)).reshape(Cout, Kp).astype(dtype)

    x_flat = x_nchw.reshape(N, Cin0, HW)      # free reshape, no HBM pass

    per_image_bytes = int(2 * (Cin0 + Cout) * HW * itemsize)     # double-buffered IO
    fixed_bytes = int(2 * (coords.size + masks.size + w_fused.size) * itemsize
                      + (Cin_pad * L + Kp * T) * itemsize)
    vmem_cap = _tpu_vmem_capacity_bytes()
    Nb, vmem_limit = _plan_batch_block(N, per_image_bytes, fixed_bytes, vmem_cap)

    flops = 2 * N * HW * Cout * Kp
    bytes_accessed = int((x_flat.size + coords.size + masks.size + w_fused.size
                          + N * Cout * HW) * itemsize)

    out_flat = pl.pallas_call(
        functools.partial(_coord_conv_kernel, W=W, KH=KH, KW=KW, Cin0=Cin0,
                          Cin=Cin, Cin_pad=Cin_pad, m_pad=m_pad, T=T),
        out_shape=jax.ShapeDtypeStruct((N, Cout, HW), dtype),
        grid_spec=pltpu.PrefetchScalarGridSpec(
            num_scalar_prefetch=0,
            grid=(N // Nb,),
            in_specs=[
                pl.BlockSpec((Nb, Cin0, HW), lambda n: (n, 0, 0)),
                pl.BlockSpec((n_coord, HW), lambda n: (0, 0)),   # constant: DMA'd once
                pl.BlockSpec((KW, HW), lambda n: (0, 0)),        # constant: DMA'd once
                pl.BlockSpec((Cout, Kp), lambda n: (0, 0)),      # constant: DMA'd once
            ],
            out_specs=pl.BlockSpec((Nb, Cout, HW), lambda n: (n, 0, 0)),
            scratch_shapes=[
                pltpu.VMEM((Cin_pad, L), dtype),     # zero-haloed feature slab
                pltpu.VMEM((Kp, T), dtype),          # im2col slab for one HW tile
            ],
        ),
        compiler_params=pltpu.CompilerParams(
            dimension_semantics=("parallel",),
            vmem_limit_bytes=vmem_limit),
        cost_estimate=pl.CostEstimate(
            flops=flops, transcendentals=0, bytes_accessed=bytes_accessed),
    )(x_flat, coords, masks, w_fused)

    return out_flat.reshape(N, Cout, H, W)


# ----------------------------- pure-JAX reference -----------------------------

def add_coords(x_nchw, with_radius=False):
    """Replica of AddCoords.forward (NCHW)."""
    N, C, H, W = x_nchw.shape
    dt = x_nchw.dtype
    xx = (jnp.arange(H, dtype=jnp.float32) / (H - 1)) * 2.0 - 1.0
    yy = (jnp.arange(W, dtype=jnp.float32) / (W - 1)) * 2.0 - 1.0
    xx_c = jnp.broadcast_to(xx[None, None, :, None], (N, 1, H, W)).astype(dt)
    yy_c = jnp.broadcast_to(yy[None, None, None, :], (N, 1, H, W)).astype(dt)
    chans = [x_nchw, xx_c, yy_c]
    if with_radius:
        rr = jnp.sqrt((xx_c - 0.5) ** 2 + (yy_c - 0.5) ** 2)
        chans.append(rr)
    return jnp.concatenate(chans, axis=1)


def reference_coord_conv2d(x_nchw, weight, *, kernel_size=3, with_radius=False):
    feats = add_coords(x_nchw, with_radius=with_radius)
    pad = kernel_size // 2
    return jax.lax.conv_general_dilated(
        feats, weight, window_strides=(1, 1),
        padding=((pad, pad), (pad, pad)),
        dimension_numbers=("NCHW", "OIHW", "NCHW"))


if __name__ == "__main__":
    key = jax.random.PRNGKey(0)
    k_x, k_w, k_w2 = jax.random.split(key, 3)

    N, C, H, W = 2, 4, 16, 16
    planes, ksize = 8, 3

    x = jax.random.normal(k_x, (N, C, H, W), dtype=jnp.float32)

    def make_weight(k, inplanes):
        # Deterministic Conv2d-style init (uniform, bound = 1/sqrt(fan_in)).
        fan_in = inplanes * ksize * ksize
        bound = 1.0 / (fan_in ** 0.5)
        return jax.random.uniform(k, (planes, inplanes, ksize, ksize),
                                  minval=-bound, maxval=bound, dtype=jnp.float32)

    # with_radius=False (module default): inplanes = C + 2
    w0 = make_weight(k_w, C + 2)
    out = jax.block_until_ready(coord_conv2d(x, w0, kernel_size=ksize))
    ref = reference_coord_conv2d(x, w0, kernel_size=ksize)
    assert out.shape == (N, planes, H, W), out.shape
    assert jnp.allclose(out, ref, atol=1e-5, rtol=1e-5), float(
        jnp.max(jnp.abs(out - ref)))

    # with_radius=True: inplanes = C + 3
    w1 = make_weight(k_w2, C + 3)
    out_r = jax.block_until_ready(
        coord_conv2d(x, w1, kernel_size=ksize, with_radius=True))
    ref_r = reference_coord_conv2d(x, w1, kernel_size=ksize, with_radius=True)
    assert jnp.allclose(out_r, ref_r, atol=1e-5, rtol=1e-5), float(
        jnp.max(jnp.abs(out_r - ref_r)))

    print("KERNEL_OK")
</pallas_src>

<mosaic_0001>
module attributes {stable_mosaic.version = 11 : i64} {
  func.func @_coord_conv_kernel(%arg0: i32, %arg1: memref<2x4x256xf32, #tpu.memory_space<vmem>>, %arg2: memref<2x256xf32, #tpu.memory_space<vmem>>, %arg3: memref<3x256xf32, #tpu.memory_space<vmem>>, %arg4: memref<8x72xf32, #tpu.memory_space<vmem>>, %arg5: memref<2x8x256xf32, #tpu.memory_space<vmem>>, %arg6: memref<8x512xf32, #tpu.memory_space<vmem>>, %arg7: memref<72x256xf32, #tpu.memory_space<vmem>>) attributes {dimension_semantics = [#tpu.dimension_semantics<parallel>], iteration_bounds = array<i64: 1>, scalar_prefetch = 0 : i64, scratch_operands = 2 : i64, tpu.core_type = #tpu.core_type<tc>, window_params = [{transform_indices = @transform_0, window_bounds = array<i64: 2, 4, 256>}, {pipeline_mode = #tpu.pipeline_mode<synchronous>, transform_indices = @transform_1, window_bounds = array<i64: 2, 256>}, {pipeline_mode = #tpu.pipeline_mode<synchronous>, transform_indices = @transform_2, window_bounds = array<i64: 3, 256>}, {pipeline_mode = #tpu.pipeline_mode<synchronous>, transform_indices = @transform_3, window_bounds = array<i64: 8, 72>}, {transform_indices = @transform_4, window_bounds = array<i64: 2, 8, 256>}]} {
    %cst = arith.constant 0.000000e+00 : f32
    %0 = vector.broadcast %cst : f32 to vector<8x128xf32>
    %c0 = arith.constant 0 : index
    %c0_0 = arith.constant 0 : index
    %1 = vector.load %arg6[%c0, %c0_0] : memref<8x512xf32, #tpu.memory_space<vmem>>, vector<8x128xf32>
    tpu.vector_store %arg6[%c0, %c0_0], %0 {strides = array<i32>} : memref<8x512xf32, #tpu.memory_space<vmem>>, vector<8x128xf32>,
    %c0_1 = arith.constant 0 : index
    %c384 = arith.constant 384 : index
    %2 = vector.load %arg6[%c0_1, %c384] : memref<8x512xf32, #tpu.memory_space<vmem>>, vector<8x128xf32>
    tpu.vector_store %arg6[%c0_1, %c384], %0 {strides = array<i32>} : memref<8x512xf32, #tpu.memory_space<vmem>>, vector<8x128xf32>,
    %cst_2 = arith.constant 0.000000e+00 : f32
    %3 = vector.broadcast %cst_2 : f32 to vector<2x256xf32>
    %c6 = arith.constant 6 : index
    %c128 = arith.constant 128 : index
    %4 = vector.load %arg6[%c6, %c128] : memref<8x512xf32, #tpu.memory_space<vmem>>, vector<2x256xf32>
    tpu.vector_store %arg6[%c6, %c128], %3 {strides = array<i32>} : memref<8x512xf32, #tpu.memory_space<vmem>>, vector<2x256xf32>,
    %c0_3 = arith.constant 0 : index
    %c0_4 = arith.constant 0 : index
    %5 = vector.load %arg2[%c0_3, %c0_4] : memref<2x256xf32, #tpu.memory_space<vmem>>, vector<2x256xf32>
    %c4 = arith.constant 4 : index
    %c128_5 = arith.constant 128 : index
    %6 = vector.load %arg6[%c4, %c128_5] : memref<8x512xf32, #tpu.memory_space<vmem>>, vector<2x256xf32>
    tpu.vector_store %arg6[%c4, %c128_5], %5 {strides = array<i32>} : memref<8x512xf32, #tpu.memory_space<vmem>>, vector<2x256xf32>,
    %c0_i32 = arith.constant 0 : i32
    %c2_i32 = arith.constant 2 : i32
    %7 = arith.addi %c0_i32, %c2_i32 : i32
    %c1_i32 = arith.constant 1 : i32
    scf.for %arg8 = %c0_i32 to %7 step %c1_i32  : i32 {
      %8 = arith.index_cast %arg8 : i32 to index
      %c0_7 = arith.constant 0 : index
      %c0_8 = arith.constant 0 : index
      %9 = vector.load %arg1[%8, %c0_7, %c0_8] : memref<2x4x256xf32, #tpu.memory_space<vmem>>, vector<1x4x256xf32>
      %10 = vector.shape_cast %9 : vector<1x4x256xf32> to vector<4x256xf32>
      %c0_9 = arith.constant 0 : index
      %c128_10 = arith.constant 128 : index
      %11 = vector.load %arg6[%c0_9, %c128_10] : memref<8x512xf32, #tpu.memory_space<vmem>>, vector<4x256xf32>
      tpu.vector_store %arg6[%c0_9, %c128_10], %10 {strides = array<i32>} : memref<8x512xf32, #tpu.memory_space<vmem>>, vector<4x256xf32>,
      %c0_11 = arith.constant 0 : index
      %c0_12 = arith.constant 0 : index
      %12 = vector.load %arg3[%c0_11, %c0_12] : memref<3x256xf32, #tpu.memory_space<vmem>>, vector<1x256xf32>
      %13 = vector.shape_cast %12 : vector<1x256xf32> to vector<1x256xf32>
      %14 = vector.broadcast %13 : vector<1x256xf32> to vector<8x256xf32>
      %c2 = arith.constant 2 : index
      %c0_13 = arith.constant 0 : index
      %15 = vector.load %arg3[%c2, %c0_13] : memref<3x256xf32, #tpu.memory_space<vmem>>, vector<1x256xf32>
      %16 = vector.shape_cast %15 : vector<1x256xf32> to vector<1x256xf32>
      %17 = vector.broadcast %16 : vector<1x256xf32> to vector<8x256xf32>
      %c0_14 = arith.constant 0 : index
      %c111 = arith.constant 111 : index
      %18 = vector.load %arg6[%c0_14, %c111] : memref<8x512xf32, #tpu.memory_space<vmem>>, vector<8x256xf32>
      %19 = arith.mulf %18, %14 : vector<8x256xf32>
      %c0_15 = arith.constant 0 : index
      %c0_16 = arith.constant 0 : index
      %20 = vector.load %arg7[%c0_15, %c0_16] : memref<72x256xf32, #tpu.memory_space<vmem>>, vector<8x256xf32>
      tpu.vector_store %arg7[%c0_15, %c0_16], %19 {strides = array<i32>} : memref<72x256xf32, #tpu.memory_space<vmem>>, vector<8x256xf32>,
      %c0_17 = arith.constant 0 : index
      %c112 = arith.constant 112 : index
      %21 = vector.load %arg6[%c0_17, %c112] : memref<8x512xf32, #tpu.memory_space<vmem>>, vector<8x256xf32>
      %c8 = arith.constant 8 : index
      %c0_18 = arith.constant 0 : index
      %22 = vector.load %arg7[%c8, %c0_18] : memref<72x256xf32, #tpu.memory_space<vmem>>, vector<8x256xf32>
      tpu.vector_store %arg7[%c8, %c0_18], %21 {strides = array<i32>} : memref<72x256xf32, #tpu.memory_space<vmem>>, vector<8x256xf32>,
      %c0_19 = arith.constant 0 : index
      %c113 = arith.constant 113 : index
      %23 = vector.load %arg6[%c0_19, %c113] : memref<8x512xf32, #tpu.memory_space<vmem>>, vector<8x256xf32>
      %24 = arith.mulf %23, %17 : vector<8x256xf32>
      %c16 = arith.constant 16 : index
      %c0_20 = arith.constant 0 : index
      %25 = vector.load %arg7[%c16, %c0_20] : memref<72x256xf32, #tpu.memory_space<vmem>>, vector<8x256xf32>
      tpu.vector_store %arg7[%c16, %c0_20], %24 {strides = array<i32>} : memref<72x256xf32, #tpu.memory_space<vmem>>, vector<8x256xf32>,
      %c0_21 = arith.constant 0 : index
      %c127 = arith.constant 127 : index
      %26 = vector.load %arg6[%c0_21, %c127] : memref<8x512xf32, #tpu.memory_space<vmem>>, vector<8x256xf32>
      %27 = arith.mulf %26, %14 : vector<8x256xf32>
      %c24 = arith.constant 24 : index
      %c0_22 = arith.constant 0 : index
      %28 = vector.load %arg7[%c24, %c0_22] : memref<72x256xf32, #tpu.memory_space<vmem>>, vector<8x256xf32>
      tpu.vector_store %arg7[%c24, %c0_22], %27 {strides = array<i32>} : memref<72x256xf32, #tpu.memory_space<vmem>>, vector<8x256xf32>,
      %c0_23 = arith.constant 0 : index
      %c128_24 = arith.constant 128 : index
      %29 = vector.load %arg6[%c0_23, %c128_24] : memref<8x512xf32, #tpu.memory_space<vmem>>, vector<8x256xf32>
      %c32 = arith.constant 32 : index
      %c0_25 = arith.constant 0 : index
      %30 = vector.load %arg7[%c32, %c0_25] : memref<72x256xf32, #tpu.memory_space<vmem>>, vector<8x256xf32>
      tpu.vector_store %arg7[%c32, %c0_25], %29 {strides = array<i32>} : memref<72x256xf32, #tpu.memory_space<vmem>>, vector<8x256xf32>,
      %c0_26 = arith.constant 0 : index
      %c129 = arith.constant 129 : index
      %31 = vector.load %arg6[%c0_26, %c129] : memref<8x512xf32, #tpu.memory_space<vmem>>, vector<8x256xf32>
      %32 = arith.mulf %31, %17 : vector<8x256xf32>
      %c40 = arith.constant 40 : index
      %c0_27 = arith.constant 0 : index
      %33 = vector.load %arg7[%c40, %c0_27] : memref<72x256xf32, #tpu.memory_space<vmem>>, vector<8x256xf32>
      tpu.vector_store %arg7[%c40, %c0_27], %32 {strides = array<i32>} : memref<72x256xf32, #tpu.memory_space<vmem>>, vector<8x256xf32>,
      %c0_28 = arith.constant 0 : index
      %c143 = arith.constant 143 : index
      %34 = vector.load %arg6[%c0_28, %c143] : memref<8x512xf32, #tpu.memory_space<vmem>>, vector<8x256xf32>
      %35 = arith.mulf %34, %14 : vector<8x256xf32>
      %c48 = arith.constant 48 : index
      %c0_29 = arith.constant 0 : index
      %36 = vector.load %arg7[%c48, %c0_29] : memref<72x256xf32, #tpu.memory_space<vmem>>, vector<8x256xf32>
      tpu.vector_store %arg7[%c48, %c0_29], %35 {strides = array<i32>} : memref<72x256xf32, #tpu.memory_space<vmem>>, vector<8x256xf32>,
      %c0_30 = arith.constant 0 : index
      %c144 = arith.constant 144 : index
      %37 = vector.load %arg6[%c0_30, %c144] : memref<8x512xf32, #tpu.memory_space<vmem>>, vector<8x256xf32>
      %c56 = arith.constant 56 : index
      %c0_31 = arith.constant 0 : index
      %38 = vector.load %arg7[%c56, %c0_31] : memref<72x256xf32, #tpu.memory_space<vmem>>, vector<8x256xf32>
      tpu.vector_store %arg7[%c56, %c0_31], %37 {strides = array<i32>} : memref<72x256xf32, #tpu.memory_space<vmem>>, vector<8x256xf32>,
      %c0_32 = arith.constant 0 : index
      %c145 = arith.constant 145 : index
      %39 = vector.load %arg6[%c0_32, %c145] : memref<8x512xf32, #tpu.memory_space<vmem>>, vector<8x256xf32>
      %40 = arith.mulf %39, %17 : vector<8x256xf32>
      %c64 = arith.constant 64 : index
      %c0_33 = arith.constant 0 : index
      %41 = vector.load %arg7[%c64, %c0_33] : memref<72x256xf32, #tpu.memory_space<vmem>>, vector<8x256xf32>
      tpu.vector_store %arg7[%c64, %c0_33], %40 {strides = array<i32>} : memref<72x256xf32, #tpu.memory_space<vmem>>, vector<8x256xf32>,
      %c0_34 = arith.constant 0 : index
      %c0_35 = arith.constant 0 : index
      %42 = vector.load %arg4[%c0_34, %c0_35] : memref<8x72xf32, #tpu.memory_space<vmem>>, vector<8x72xf32>
      %c0_36 = arith.constant 0 : index
      %c0_37 = arith.constant 0 : index
      %43 = vector.load %arg7[%c0_36, %c0_37] : memref<72x256xf32, #tpu.memory_space<vmem>>, vector<72x256xf32>
      %cst_38 = arith.constant dense<0.000000e+00> : vector<8x256xf32>
      %44 = tpu.matmul %42, %43, %cst_38 {dimension_numbers = #tpu.dot_dimension_numbers<[1], [0], [0], [1], [0, 0, 1, 1], [], []>} : vector<8x72xf32>, vector<72x256xf32>, vector<8x256xf32> -> vector<8x256xf32>
      %45 = arith.index_cast %arg8 : i32 to index
      %c0_39 = arith.constant 0 : index
      %c0_40 = arith.constant 0 : index
      %46 = vector.load %arg5[%45, %c0_39, %c0_40] : memref<2x8x256xf32, #tpu.memory_space<vmem>>, vector<1x8x256xf32>
      %47 = vector.shape_cast %46 : vector<1x8x256xf32> to vector<8x256xf32>
      %48 = vector.shape_cast %44 : vector<8x256xf32> to vector<1x8x256xf32>
      tpu.vector_store %arg5[%45, %c0_39, %c0_40], %48 {strides = array<i32>} : memref<2x8x256xf32, #tpu.memory_space<vmem>>, vector<1x8x256xf32>,
    }
    %c2_i32_6 = arith.constant 2 : i32
    return
  }
  func.func @transform_0(%arg0: i32) -> (i32, i32, i32) {
    %c0_i32 = arith.constant 0 : i32
    %c0_i32_0 = arith.constant 0 : i32
    %c0_i32_1 = arith.constant 0 : i32
    return %arg0, %c0_i32, %c0_i32_0 : i32, i32, i32
  }
  func.func @transform_1(%arg0: i32) -> (i32, i32) {
    %c0_i32 = arith.constant 0 : i32
    %c0_i32_0 = arith.constant 0 : i32
    %c0_i32_1 = arith.constant 0 : i32
    return %c0_i32, %c0_i32_0 : i32, i32
  }
  func.func @transform_2(%arg0: i32) -> (i32, i32) {
    %c0_i32 = arith.constant 0 : i32
    %c0_i32_0 = arith.constant 0 : i32
    %c0_i32_1 = arith.constant 0 : i32
    return %c0_i32, %c0_i32_0 : i32, i32
  }
  func.func @transform_3(%arg0: i32) -> (i32, i32) {
    %c0_i32 = arith.constant 0 : i32
    %c0_i32_0 = arith.constant 0 : i32
    %c0_i32_1 = arith.constant 0 : i32
    return %c0_i32, %c0_i32_0 : i32, i32
  }
  func.func @transform_4(%arg0: i32) -> (i32, i32, i32) {
    %c0_i32 = arith.constant 0 : i32
    %c0_i32_0 = arith.constant 0 : i32
    %c0_i32_1 = arith.constant 0 : i32
    return %arg0, %c0_i32, %c0_i32_0 : i32, i32, i32
  }
}

</mosaic_0001>

<llo_original>
// kernel: tpu_custom_call.1
$region0: #{tpu_custom_call.1}
  #allocation0 [shape = 'u32[]', space=smem, size = 0x4, offset = 0x4, fixed_abs, tag = 'smem constant byte address 0x4 - core index']
  #allocation1 [shape = 'u32[144,128]{1,0:T(1,128)}', space=vmem, size = 0x12000, scoped, tag = 'internal scratch']
  #allocation2 [shape = 'f32[8,512]{1,0:T(8,128)}', space=vmem, size = 0x4000, scoped, tag = 'scratch operand']
  #allocation3 [shape = 'f32[72,256]{1,0:T(8,128)}', space=vmem, size = 0x12000, scoped, tag = 'scratch operand']
  %s0 = inlined_call_operand.hbm [shape: f32[2,4,256], index: 0, kind: input, shape index: {}]
  %s1 = inlined_call_operand.hbm [shape: f32[2,256], index: 1, kind: input, shape index: {}]
  %s2 = inlined_call_operand.hbm [shape: f32[3,256], index: 2, kind: input, shape index: {}]
  %s3 = inlined_call_operand.hbm [shape: f32[8,72], index: 3, kind: input, shape index: {}]
  %s4 = inlined_call_operand.hbm [shape: f32[2,8,256], index: 4, kind: output, shape index: {}]
  %s5 = sld [smem:[#allocation0]]
  $region49: #{tpu_custom_call.1} parent=0
    _
  %s7 = ssub.s32 1, %s5
  %s8 = scalar_select 0, %s7, %s5
  $region1: #{tpu_custom_call.1} parent=0
    #allocation4 [shape = 'u8[8192]{0}', space=vmem, size = 0x2000, scoped, tag = 'input window, operand 0, single buffered']
    #allocation5 [shape = 's32[1]{0}', space=sflag, size = 0x4, scoped, tag = 'scoped memory for tpu_custom_call.1']
    #allocation6 [shape = 's32[1]{0}', space=sflag, size = 0x4, scoped, tag = 'scoped memory for tpu_custom_call.1']
    #allocation7 [shape = 'u8[2048]{0}', space=vmem, size = 0x800, scoped, tag = 'input window, operand 1, single buffered']
    #allocation8 [shape = 's32[1]{0}', space=sflag, size = 0x4, scoped, tag = 'scoped memory for tpu_custom_call.1']
    #allocation9 [shape = 'u8[4096]{0}', space=vmem, size = 0x1000, scoped, tag = 'input window, operand 2, single buffered']
    #allocation10 [shape = 'u8[4096]{0}', space=vmem, size = 0x1000, scoped, tag = 'input window, operand 3, single buffered']
    #allocation11 [shape = 's32[1]{0}', space=sflag, size = 0x4, scoped, tag = 'scoped memory for tpu_custom_call.1']
    #allocation12 [shape = 'u8[16384]{0}', space=vmem, size = 0x4000, scoped, tag = 'output window, operand 0, single buffered']
    %9 = vsyncpa [#allocation5], 0
    %10 = vsyncpa [#allocation8], 0
    %11 = vsyncpa [#allocation11], 0
    %12 = vsyncpa [#allocation6], 0
    // Predicated region
    $region2: #{tpu_custom_call.1} parent=1 // pred_check
      _
    $region3: #{tpu_custom_call.1} parent=1 // pred_check_branch
      %14 = sbr.rel (0) target = $region5
    $region4: #{tpu_custom_call.1} parent=1 // pred_region
      %s16 = ssub.s32 256, 256
      %17 = vsyncadd [#allocation5], %s16
      %s18 = sshll.u32 [#allocation4], 4
      %s19 = int_to_ptr.vmem [resolvable:$true] %s18
      %24 = dma.hbm_to_vmem [thread:$0]  %s0, 256, %s19, [#allocation5], 128, 128, 8
    $region5: #{tpu_custom_call.1} parent=1 // pred_fallthru
      _
    // Predicated region
    $region6: #{tpu_custom_call.1} parent=1 // pred_check
      _
    $region7: #{tpu_custom_call.1} parent=1 // pred_check_branch
      %26 = sbr.rel (0) target = $region9
    $region8: #{tpu_custom_call.1} parent=1 // pred_region
      %s28 = ssub.s32 64, 64
      %29 = vsyncadd [#allocation8], %s28
      %s31 = sshll.u32 [#allocation7], 4
      %s32 = int_to_ptr.vmem [resolvable:$true] %s31
      %34 = dma.hbm_to_vmem [thread:$0]  %s1, 64, %s32, [#allocation8]
    $region9: #{tpu_custom_call.1} parent=1 // pred_fallthru
      _
    // Predicated region
    $region10: #{tpu_custom_call.1} parent=1 // pred_check
      _
    $region11: #{tpu_custom_call.1} parent=1 // pred_check_branch
      %36 = sbr.rel (0) target = $region13
    $region12: #{tpu_custom_call.1} parent=1 // pred_region
      %s38 = ssub.s32 128, 128
      %39 = vsyncadd [#allocation8], %s38
      %s41 = sshll.u32 [#allocation9], 4
      %s42 = int_to_ptr.vmem [resolvable:$true] %s41
      %44 = dma.hbm_to_vmem [thread:$0]  %s2, 128, %s42, [#allocation8]
    $region13: #{tpu_custom_call.1} parent=1 // pred_fallthru
      _
    // Predicated region
    $region14: #{tpu_custom_call.1} parent=1 // pred_check
      _
    $region15: #{tpu_custom_call.1} parent=1 // pred_check_branch
      %46 = sbr.rel (0) target = $region17
    $region16: #{tpu_custom_call.1} parent=1 // pred_region
      %s48 = ssub.s32 128, 128
      %49 = vsyncadd [#allocation11], %s48
      %s51 = sshll.u32 [#allocation10], 4
      %s52 = int_to_ptr.vmem [resolvable:$true] %s51
      %54 = dma.hbm_to_vmem [thread:$0]  %s3, 128, %s52, [#allocation11]
    $region17: #{tpu_custom_call.1} parent=1 // pred_fallthru
      _
    // Predicated region
    $region18: #{tpu_custom_call.1} parent=1 // pred_check
      _
    $region19: #{tpu_custom_call.1} parent=1 // pred_check_branch
      %56 = sbr.rel (0) target = $region21
    $region20: #{tpu_custom_call.1} parent=1 // pred_region
      %57 = dma.done [#allocation5], 256
    $region21: #{tpu_custom_call.1} parent=1 // pred_fallthru
      _
    // Predicated region
    $region22: #{tpu_custom_call.1} parent=1 // pred_check
      _
    $region23: #{tpu_custom_call.1} parent=1 // pred_check_branch
      %59 = sbr.rel (0) target = $region25
    $region24: #{tpu_custom_call.1} parent=1 // pred_region
      %60 = dma.done [#allocation8], 64
    $region25: #{tpu_custom_call.1} parent=1 // pred_fallthru
      _
    // Predicated region
    $region26: #{tpu_custom_call.1} parent=1 // pred_check
      _
    $region27: #{tpu_custom_call.1} parent=1 // pred_check_branch
      %62 = sbr.rel (0) target = $region29
    $region28: #{tpu_custom_call.1} parent=1 // pred_region
      %63 = dma.done [#allocation8], 128
    $region29: #{tpu_custom_call.1} parent=1 // pred_fallthru
      _
    // Predicated region
    $region30: #{tpu_custom_call.1} parent=1 // pred_check
      _
    $region31: #{tpu_custom_call.1} parent=1 // pred_check_branch
      %65 = sbr.rel (0) target = $region33
    $region32: #{tpu_custom_call.1} parent=1 // pred_region
      %66 = dma.done [#allocation11], 128
    $region33: #{tpu_custom_call.1} parent=1 // pred_fallthru
      _
    %67 = vst [vmem:[#allocation2] sm:$0xff] 0.0
    %68 = vst [vmem:[#allocation2 + $0x18] sm:$0xff] 0.0
    %69 = vst [vmem:[#allocation2 + $0x8] sm:$0xc0] 0.0
    %70 = vst [vmem:[#allocation2 + $0x10] sm:$0xc0] 0.0
    %v71 = vld [vmem:[#allocation7] sm:$0xf]
    %v74 = vunpack.c.l.s4 1983009808
    %v75 = vunpack.c.0.s8 %v74
    %v76 = vlaneseq
    %v77 = vshrl.u32 %v76, 7
    %v78 = vsub.s32 %v75, %v77
    %v79 = vrot.slane %v71, %v78
    %v80 = vcombine.low %v79, %v79
    %83 = vst [vmem:[#allocation2 + $0x8] sm:$0x30] %v80
    %84 = vst [vmem:[#allocation2 + $0x10] sm:$0x30] %v79
    loop: start=0, step=1, limit=2
    $region34: #{tpu_custom_call.1} parent=1 // loop_pre_header
      _
    $region35: #{tpu_custom_call.1} parent=1 // loop_header
      %s86 = sphi 0, %s90
      %p87 = scmp.ge.s32.totalorder %s86, 2
    $region36: #{tpu_custom_call.1} parent=1 // loop_header_branch
      %89 = sbr.rel (%p87) target = $region40
    $region37: #{tpu_custom_call.1} parent=1 // loop_body
      %s91 = smul.u32 %s86, 2
      %s92 = smul.addr %s91, 4
      %s93 = scalar_lea.vmem [#allocation4], %s92
      %v94 = vld [vmem:[%s93] sm:$0xff]
      %v96 = vcombine.high %v94, %v94
      %98 = vst [vmem:[#allocation2 + $0x8] sm:$0xf] %v94
      %99 = vst [vmem:[#allocation2 + $0x10] sm:$0xf] %v96
      %v100 = vld [vmem:[#allocation9] ss:$4 sm:$0x3]
      %v102 = vlaneseq
      %v103 = vshrl.u32 %v102, 7
      %v104 = vsub.s32 0, %v103
      %v105 = vrot.slane %v100, %v104
      %v106 = vlaneseq
      %v107 = vshrl.u32 %v106, 7
      %v108 = vsub.s32 1, %v107
      %v109 = vrot.slane %v100, %v108
      %s110 = scalar_lea.vmem [#allocation9], 2
      %v111 = vld [vmem:[%s110] ss:$4 sm:$0x3]
      %v113 = vlaneseq
      %v114 = vshrl.u32 %v113, 7
      %v115 = vsub.s32 0, %v114
      %v116 = vrot.slane %v111, %v115
      %v117 = vlaneseq
      %v118 = vshrl.u32 %v117, 7
      %v119 = vsub.s32 1, %v118
      %v120 = vrot.slane %v111, %v119
      %v121 = vld [vmem:[#allocation2] sm:$0xff]
      %v122 = vld [vmem:[#allocation2 + $0x8] sm:$0xff]
      %v123 = vld [vmem:[#allocation2 + $0x10] sm:$0xff]
      %124 = vrot.lane.b32.xlu0 %v105, 111
      %v125 = vpop.permute.xlu0 %124
      %126 = vrot.lane.b32.xlu0 %v109, 111
      %v127 = vpop.permute.xlu0 %126
      %vm128 = vcmask 908288
      %v129 = vsel %vm128, %v125, %v127
      %v133 = vmul.f32 %v121, %v125
      %v134 = vmul.f32 %v122, %v129
      %v135 = vmul.f32 %v123, %v127
      %139 = vrot.lane.b32.xlu0 %v133, 17
      %v140 = vpop.permute.xlu0 %139
      %141 = vrot.lane.b32.xlu0 %v134, 17
      %v142 = vpop.permute.xlu0 %141
      %143 = vrot.lane.b32.xlu0 %v135, 17
      %v144 = vpop.permute.xlu0 %143
      %vm145 = vcmask 138240
      %v146 = vsel %vm145, %v140, %v142
      %v147 = vsel %vm145, %v142, %v144
      %150 = vst [vmem:[#allocation3] sm:$0xff] %v146
      %151 = vst [vmem:[#allocation3 + $0x8] sm:$0xff] %v147
      %v152 = vld [vmem:[#allocation2] sm:$0xff]
      %v153 = vld [vmem:[#allocation2 + $0x8] sm:$0xff]
      %v154 = vld [vmem:[#allocation2 + $0x10] sm:$0xff]
      %158 = vrot.lane.b32.xlu0 %v152, 16
      %v159 = vpop.permute.xlu0 %158
      %160 = vrot.lane.b32.xlu0 %v153, 16
      %v161 = vpop.permute.xlu0 %160
      %162 = vrot.lane.b32.xlu0 %v154, 16
      %v163 = vpop.permute.xlu0 %162
      %vm164 = vcmask 130048
      %v165 = vsel %vm164, %v159, %v161
      %v166 = vsel %vm164, %v161, %v163
      %169 = vst [vmem:[#allocation3 + $0x10] sm:$0xff] %v165
      %170 = vst [vmem:[#allocation3 + $0x18] sm:$0xff] %v166
      %v171 = vld [vmem:[#allocation2] sm:$0xff]
      %v172 = vld [vmem:[#allocation2 + $0x8] sm:$0xff]
      %v173 = vld [vmem:[#allocation2 + $0x10] sm:$0xff]
      %174 = vrot.lane.b32.xlu0 %v116, 113
      %v175 = vpop.permute.xlu0 %174
      %176 = vrot.lane.b32.xlu0 %v120, 113
      %v177 = vpop.permute.xlu0 %176
      %vm178 = vcmask 924672
      %v179 = vsel %vm178, %v175, %v177
      %v183 = vmul.f32 %v171, %v175
      %v184 = vmul.f32 %v172, %v179
      %v185 = vmul.f32 %v173, %v177
      %189 = vrot.lane.b32.xlu0 %v183, 15
      %v190 = vpop.permute.xlu0 %189
      %191 = vrot.lane.b32.xlu0 %v184, 15
      %v192 = vpop.permute.xlu0 %191
      %193 = vrot.lane.b32.xlu0 %v185, 15
      %v194 = vpop.permute.xlu0 %193
      %vm195 = vcmask 121856
      %v196 = vsel %vm195, %v190, %v192
      %v197 = vsel %vm195, %v192, %v194
      %200 = vst [vmem:[#allocation3 + $0x20] sm:$0xff] %v196
      %201 = vst [vmem:[#allocation3 + $0x28] sm:$0xff] %v197
      %v202 = vld [vmem:[#allocation2] sm:$0xff]
      %v203 = vld [vmem:[#allocation2 + $0x8] sm:$0xff]
      %v204 = vld [vmem:[#allocation2 + $0x10] sm:$0xff]
      %205 = vrot.lane.b32.xlu0 %v105, 127
      %v206 = vpop.permute.xlu0 %205
      %207 = vrot.lane.b32.xlu0 %v109, 127
      %v208 = vpop.permute.xlu0 %207
      %vm209 = vcmask 1039360
      %v210 = vsel %vm209, %v206, %v208
      %v214 = vmul.f32 %v202, %v206
      %v215 = vmul.f32 %v203, %v210
      %v216 = vmul.f32 %v204, %v208
      %220 = vrot.lane.b32.xlu0 %v214, 1
      %v221 = vpop.permute.xlu0 %220
      %222 = vrot.lane.b32.xlu0 %v215, 1
      %v223 = vpop.permute.xlu0 %222
      %224 = vrot.lane.b32.xlu0 %v216, 1
      %v225 = vpop.permute.xlu0 %224
      %vm226 = vcmask 7168
      %v227 = vsel %vm226, %v221, %v223
      %v228 = vsel %vm226, %v223, %v225
      %231 = vst [vmem:[#allocation3 + $0x30] sm:$0xff] %v227
      %232 = vst [vmem:[#allocation3 + $0x38] sm:$0xff] %v228
      %v233 = vld [vmem:[#allocation2 + $0x8] sm:$0xff]
      %v234 = vld [vmem:[#allocation2 + $0x10] sm:$0xff]
      %235 = vst [vmem:[#allocation3 + $0x40] sm:$0xff] %v233
      %236 = vst [vmem:[#allocation3 + $0x48] sm:$0xff] %v234
      %v237 = vld [vmem:[#allocation2 + $0x8] sm:$0xff]
      %v238 = vld [vmem:[#allocation2 + $0x10] sm:$0xff]
      %v239 = vld [vmem:[#allocation2 + $0x18] sm:$0xff]
      %240 = vrot.lane.b32.xlu0 %v116, 1
      %v241 = vpop.permute.xlu0 %240
      %242 = vrot.lane.b32.xlu0 %v120, 1
      %v243 = vpop.permute.xlu0 %242
      %v244 = vsel %vm226, %v241, %v243
      %v248 = vmul.f32 %v237, %v241
      %v249 = vmul.f32 %v238, %v244
      %v250 = vmul.f32 %v239, %v243
      %254 = vrot.lane.b32.xlu0 %v248, 127
      %v255 = vpop.permute.xlu0 %254
      %256 = vrot.lane.b32.xlu0 %v249, 127
      %v257 = vpop.permute.xlu0 %256
      %258 = vrot.lane.b32.xlu0 %v250, 127
      %v259 = vpop.permute.xlu0 %258
      %v260 = vsel %vm209, %v255, %v257
      %v261 = vsel %vm209, %v257, %v259
      %264 = vst [vmem:[#allocation3 + $0x50] sm:$0xff] %v260
      %265 = vst [vmem:[#allocation3 + $0x58] sm:$0xff] %v261
      %v266 = vld [vmem:[#allocation2 + $0x8] sm:$0xff]
      %v267 = vld [vmem:[#allocation2 + $0x10] sm:$0xff]
      %v268 = vld [vmem:[#allocation2 + $0x18] sm:$0xff]
      %269 = vrot.lane.b32.xlu0 %v105, 15
      %v270 = vpop.permute.xlu0 %269
      %271 = vrot.lane.b32.xlu0 %v109, 15
      %v272 = vpop.permute.xlu0 %271
      %v273 = vsel %vm195, %v270, %v272
      %v277 = vmul.f32 %v266, %v270
      %v278 = vmul.f32 %v267, %v273
      %v279 = vmul.f32 %v268, %v272
      %283 = vrot.lane.b32.xlu0 %v277, 113
      %v284 = vpop.permute.xlu0 %283
      %285 = vrot.lane.b32.xlu0 %v278, 113
      %v286 = vpop.permute.xlu0 %285
      %287 = vrot.lane.b32.xlu0 %v279, 113
      %v288 = vpop.permute.xlu0 %287
      %v289 = vsel %vm178, %v284, %v286
      %v290 = vsel %vm178, %v286, %v288
      %293 = vst [vmem:[#allocation3 + $0x60] sm:$0xff] %v289
      %294 = vst [vmem:[#allocation3 + $0x68] sm:$0xff] %v290
      %v295 = vld [vmem:[#allocation2 + $0x8] sm:$0xff]
      %v296 = vld [vmem:[#allocation2 + $0x10] sm:$0xff]
      %v297 = vld [vmem:[#allocation2 + $0x18] sm:$0xff]
      %301 = vrot.lane.b32.xlu0 %v295, 112
      %v302 = vpop.permute.xlu0 %301
      %303 = vrot.lane.b32.xlu0 %v296, 112
      %v304 = vpop.permute.xlu0 %303
      %305 = vrot.lane.b32.xlu0 %v297, 112
      %v306 = vpop.permute.xlu0 %305
      %vm307 = vcmask 916480
      %v308 = vsel %vm307, %v302, %v304
      %v309 = vsel %vm307, %v304, %v306
      %312 = vst [vmem:[#allocation3 + $0x70] sm:$0xff] %v308
      %313 = vst [vmem:[#allocation3 + $0x78] sm:$0xff] %v309
      %v314 = vld [vmem:[#allocation2 + $0x8] sm:$0xff]
      %v315 = vld [vmem:[#allocation2 + $0x10] sm:$0xff]
      %v316 = vld [vmem:[#allocation2 + $0x18] sm:$0xff]
      %317 = vrot.lane.b32.xlu0 %v116, 17
      %v318 = vpop.permute.xlu0 %317
      %319 = vrot.lane.b32.xlu0 %v120, 17
      %v320 = vpop.permute.xlu0 %319
      %v321 = vsel %vm145, %v318, %v320
      %v325 = vmul.f32 %v314, %v318
      %v326 = vmul.f32 %v315, %v321
      %v327 = vmul.f32 %v316, %v320
      %331 = vrot.lane.b32.xlu0 %v325, 111
      %v332 = vpop.permute.xlu0 %331
      %333 = vrot.lane.b32.xlu0 %v326, 111
      %v334 = vpop.permute.xlu0 %333
      %335 = vrot.lane.b32.xlu0 %v327, 111
      %v336 = vpop.permute.xlu0 %335
      %v337 = vsel %vm128, %v332, %v334
      %v338 = vsel %vm128, %v334, %v336
      %341 = vst [vmem:[#allocation3 + $0x80] sm:$0xff] %v337
      %342 = vst [vmem:[#allocation3 + $0x88] sm:$0xff] %v338
      %v343 = vld [vmem:[#allocation10] sm:$0xff]
      %v344 = vld [vmem:[#allocation3] sm:$0xff]
      %v345 = vld [vmem:[#allocation3 + $0x8] sm:$0xff]
      %v346 = vld [vmem:[#allocation3 + $0x10] sm:$0xff]
      %v347 = vld [vmem:[#allocation3 + $0x18] sm:$0xff]
      %v348 = vld [vmem:[#allocation3 + $0x20] sm:$0xff]
      %v349 = vld [vmem:[#allocation3 + $0x28] sm:$0xff]
      %v350 = vld [vmem:[#allocation3 + $0x30] sm:$0xff]
      %v351 = vld [vmem:[#allocation3 + $0x38] sm:$0xff]
      %v352 = vld [vmem:[#allocation3 + $0x40] sm:$0xff]
      %v353 = vld [vmem:[#allocation3 + $0x48] sm:$0xff]
      %v354 = vld [vmem:[#allocation3 + $0x50] sm:$0xff]
      %v355 = vld [vmem:[#allocation3 + $0x58] sm:$0xff]
      %v356 = vld [vmem:[#allocation3 + $0x60] sm:$0xff]
      %v357 = vld [vmem:[#allocation3 + $0x68] sm:$0xff]
      %v358 = vld [vmem:[#allocation3 + $0x70] sm:$0xff]
      %v359 = vld [vmem:[#allocation3 + $0x78] sm:$0xff]
      %v360 = vld [vmem:[#allocation3 + $0x80] sm:$0xff]
      %v361 = vld [vmem:[#allocation3 + $0x88] sm:$0xff]
      %vm362 = vcmask 588800
      %v364 = vsel %vm362, %v343, 0
      %366 = vmatprep.subr.mxu0 0.0
      %367 = vmatpush1.msra.mxu0 0.0
      %368 = vmatprep.subr.mxu0 0.0
      %369 = vmatpush1.msra.mxu0 0.0
      %370 = vmatprep.subr.mxu0 0.0
      %371 = vmatpush1.msra.mxu0 0.0
      %372 = vmatprep.subr.mxu0 0.0
      %373 = vmatpush1.msra.mxu0 0.0
      %374 = vmatprep.subr.mxu0 0.0
      %375 = vmatpush1.msra.mxu0 0.0
      %376 = vmatprep.subr.mxu0 0.0
      %377 = vmatpush1.msra.mxu0 0.0
      %378 = vmatprep.subr.mxu0 0.0
      %379 = vmatpush1.msra.mxu0 0.0
      %380 = vmatprep.subr.mxu0 %v361
      %381 = vmatpush1.msra.mxu0 %v360
      %382 = vmatprep.subr.mxu0 %v359
      %383 = vmatpush1.msra.mxu0 %v358
      %384 = vmatprep.subr.mxu0 %v357
      %385 = vmatpush1.msra.mxu0 %v356
      %386 = vmatprep.subr.mxu0 %v355
      %387 = vmatpush1.msra.mxu0 %v354
      %388 = vmatprep.subr.mxu0 %v353
      %389 = vmatpush1.msra.mxu0 %v352
      %390 = vmatprep.subr.mxu0 %v351
      %391 = vmatpush1.msra.mxu0 %v350
      %392 = vmatprep.subr.mxu0 %v349
      %393 = vmatpush1.msra.mxu0 %v348
      %394 = vmatprep.subr.mxu0 %v347
      %395 = vmatpush1.msra.mxu0 %v346
      %396 = vmatprep.subr.mxu0 %v345
      %397 = vmatpush1.msra.mxu0 %v344
      %398 = vmatprep.subr.mxu0 0.0
      %399 = vmatpush2.msra.mxu0 0.0
      %400 = vmatprep.subr.mxu0 0.0
      %401 = vmatpush2.msra.mxu0 0.0
      %402 = vmatprep.subr.mxu0 0.0
      %403 = vmatpush2.msra.mxu0 0.0
      %404 = vmatprep.subr.mxu0 0.0
      %405 = vmatpush2.msra.mxu0 0.0
      %406 = vmatprep.subr.mxu0 0.0
      %407 = vmatpush2.msra.mxu0 0.0
      %408 = vmatprep.subr.mxu0 0.0
      %409 = vmatpush2.msra.mxu0 0.0
      %410 = vmatprep.subr.mxu0 0.0
      %411 = vmatpush2.msra.mxu0 0.0
      %412 = vmatprep.subr.mxu0 0.0
      %413 = vmatpush2.msra.mxu0 0.0
      %414 = vmatprep.subr.mxu0 0.0
      %415 = vmatpush2.msra.mxu0 0.0
      %416 = vmatprep.subr.mxu0 0.0
      %417 = vmatpush2.msra.mxu0 0.0
      %418 = vmatprep.subr.mxu0 0.0
      %419 = vmatpush2.msra.mxu0 0.0
      %420 = vmatprep.subr.mxu0 0.0
      %421 = vmatpush2.msra.mxu0 0.0
      %422 = vmatprep.subr.mxu0 0.0
      %423 = vmatpush2.msra.mxu0 0.0
      %424 = vmatprep.subr.mxu0 0.0
      %425 = vmatpush2.msra.mxu0 0.0
      %426 = vmatprep.subr.mxu0 0.0
      %427 = vmatpush2.msra.mxu0 0.0
      %428 = vmatprep.subr.mxu0 0.0
      %429 = vmatpush2.msra.mxu0 0.0
      %430 = vmatprep.mubr.f32.mxu0 0.0
      %431 = vmatmul.mubr.f32.gmra.mxu0 %v364
      %v432 = vpop.f32.mrf.mxu0
      %v433 = vadd.f32 0.0, %v432
      %v434 = vpop.f32.mrf.mxu0
      %v435 = vadd.f32 0.0, %v434
      %436 = vdwg.mxu0
      %s437 = smul.addr %s91, 8
      %s438 = scalar_lea.vmem [#allocation12], %s437
      %439 = vst [vmem:[%s438] sm:$0xff] %v433
      %440 = vst [vmem:[%s438 + $0x8] sm:$0xff] %v435
    $region38: #{tpu_custom_call.1} parent=1 // loop_footer
      %s90 = sadd.s32 1, %s86
    $region39: #{tpu_custom_call.1} parent=1 // loop_footer_branch
      %85 = sbr.rel target = $region35
    $region40: #{tpu_custom_call.1} parent=1 // loop_exit
      _
    // Predicated region
    $region41: #{tpu_custom_call.1} parent=1 // pred_check
      _
    $region42: #{tpu_custom_call.1} parent=1 // pred_check_branch
      %442 = sbr.rel (0) target = $region44
    $region43: #{tpu_custom_call.1} parent=1 // pred_region
      %s444 = ssub.s32 512, 512
      %445 = vsyncadd [#allocation6], %s444
      %s446 = sshll.u32 [#allocation12], 4
      %s447 = int_to_ptr.vmem [resolvable:$true] %s446
      %452 = dma.vmem_to_hbm [thread:$0]  %s447, 512, %s4, [#allocation6], 256, 256, 16
    $region44: #{tpu_custom_call.1} parent=1 // pred_fallthru
      _
    // Predicated region
    $region45: #{tpu_custom_call.1} parent=1 // pred_check
      _
    $region46: #{tpu_custom_call.1} parent=1 // pred_check_branch
      %454 = sbr.rel (0) target = $region48
    $region47: #{tpu_custom_call.1} parent=1 // pred_region
      %455 = dma.done [#allocation6], 512
    $region48: #{tpu_custom_call.1} parent=1 // pred_fallthru
      _
    %456 = vsyncpa [#allocation5], 1
    %457 = vsyncpa [#allocation8], 1
    %458 = vsyncpa [#allocation11], 1
    %459 = vsyncpa [#allocation6], 1

</llo_original>
